<compile_context>
chip_gen: v7x
topology: tpu7x:2x2x1
jax: 0.10.0
libtpu: 0.0.40
codegen_flags: <defaults>
</compile_context>

<pallas_src>
import numpy as np
import jax
import jax.numpy as jnp
from jax.experimental import pallas as pl
from jax.experimental.pallas import tpu as pltpu

BN_EPS = 1e-5
LANES = 128


def _round_up(n, m):
    return ((n + m - 1) // m) * m


# ----------------------------------------------------------------------------
# Parameter construction (deterministic, mirrors MetricLearner.__init__ shapes)
# ----------------------------------------------------------------------------
def _fold_bn(gamma, beta, mean, var, eps=BN_EPS):
    scale = gamma / jnp.sqrt(var + eps)
    shift = beta - mean * scale
    return scale.reshape(1, -1), shift.reshape(1, -1)


def init_params(key, in_dim, emb_dim, num_dilations=0):
    next_dim = 2 ** (int(np.log2(in_dim)) + 1)
    base_out_dim = next_dim * 2
    conv_out_dim = base_out_dim * 2 ** num_dilations

    # conv stack: base (2 convs, dilation 1) + dilation blocks
    conv_specs = [(in_dim, next_dim, 1), (next_dim, base_out_dim, 1)]
    for i in range(num_dilations):
        cin = base_out_dim * 2 ** i
        conv_specs.append((cin, 2 * cin, 2 * 2 ** i))

    # dim_reduce dense stack: conv_out_dim -> ... -> base_out_dim
    dense_specs = []
    for i in range(num_dilations):
        din = conv_out_dim // 2 ** i
        dense_specs.append((din, din // 2))

    n_keys = 4 * (len(conv_specs) + len(dense_specs)) + 2
    keys = jax.random.split(key, n_keys)
    ki = iter(range(n_keys))

    conv_params = []
    for (cin, cout, dil) in conv_specs:
        w = jax.random.normal(keys[next(ki)], (3, cin, cout), jnp.float32) * (
            1.0 / np.sqrt(3 * cin))
        b = jax.random.normal(keys[next(ki)], (1, cout), jnp.float32) * 0.05
        gamma = 1.0 + 0.1 * jax.random.normal(keys[next(ki)], (cout,), jnp.float32)
        beta = 0.05 * jax.random.normal(keys[next(ki)], (cout,), jnp.float32)
        mean = jnp.zeros((cout,), jnp.float32)   # running_mean (default init)
        var = jnp.ones((cout,), jnp.float32)     # running_var  (default init)
        scale, shift = _fold_bn(gamma, beta, mean, var)
        conv_params.append(dict(w=w, b=b, scale=scale, shift=shift, dilation=dil))

    dense_params = []
    for (din, dout) in dense_specs:
        w = jax.random.normal(keys[next(ki)], (din, dout), jnp.float32) * (
            1.0 / np.sqrt(din))
        b = jax.random.normal(keys[next(ki)], (1, dout), jnp.float32) * 0.05
        gamma = 1.0 + 0.1 * jax.random.normal(keys[next(ki)], (dout,), jnp.float32)
        beta = 0.05 * jax.random.normal(keys[next(ki)], (dout,), jnp.float32)
        scale, shift = _fold_bn(gamma, beta, jnp.zeros((dout,), jnp.float32),
                                jnp.ones((dout,), jnp.float32))
        dense_params.append(dict(w=w, b=b, scale=scale, shift=shift))

    wf = jax.random.normal(keys[next(ki)], (base_out_dim, emb_dim), jnp.float32) * (
        1.0 / np.sqrt(base_out_dim))
    bf = jax.random.normal(keys[next(ki)], (1, emb_dim), jnp.float32) * 0.05
    return conv_params, dense_params, (wf, bf)


# ----------------------------------------------------------------------------
# Wrapper-side folding / packing / padding of parameters
# ----------------------------------------------------------------------------
def _pack_conv0(cp, dot_dtype):
    """Layer 0: taps are pre-concatenated in the input, so pack the weight as a
    single (round_up(3*c_in,128), cout_p) matrix (rows: tap0 | tap1 | tap2
    WITHOUT per-tap lane padding).  BN scale folded into the weight, conv bias
    + BN shift folded into one f32 shift row."""
    w = cp["w"].astype(jnp.float32)                       # (3, cin, cout)
    b = cp["b"].reshape(-1).astype(jnp.float32)
    scale = cp["scale"].reshape(-1).astype(jnp.float32)
    shift = cp["shift"].reshape(-1).astype(jnp.float32)
    _, cin, cout = w.shape
    k_p, cout_p = _round_up(3 * cin, LANES), _round_up(cout, LANES)
    w_fold = (w * scale[None, None, :]).reshape(3 * cin, cout)
    wp = jnp.pad(w_fold, ((0, k_p - 3 * cin), (0, cout_p - cout))).astype(dot_dtype)
    shp = jnp.pad((b * scale + shift)[None, :], ((0, 0), (0, cout_p - cout)))
    return wp, shp


def _pack_conv(cp, dot_dtype):
    """Layers >= 1: fold BN scale into the conv weight, fold (bias + BN shift)
    into one f32 row, pad channels to 128-lane multiples, and stack the 3 taps
    along rows -> (3*cin_p, cout_p).  The kernel slices the three cin_p row
    blocks and does three accumulating dots (no h_cat concat needed)."""
    w = cp["w"].astype(jnp.float32)                       # (3, cin, cout)
    b = cp["b"].reshape(-1).astype(jnp.float32)
    scale = cp["scale"].reshape(-1).astype(jnp.float32)
    shift = cp["shift"].reshape(-1).astype(jnp.float32)
    _, cin, cout = w.shape
    cin_p, cout_p = _round_up(cin, LANES), _round_up(cout, LANES)
    w_fold = w * scale[None, None, :]
    wp = jnp.concatenate(
        [jnp.pad(w_fold[k], ((0, cin_p - cin), (0, cout_p - cout))) for k in range(3)],
        axis=0).astype(dot_dtype)                         # (3*cin_p, cout_p)
    shp = jnp.pad((b * scale + shift)[None, :], ((0, 0), (0, cout_p - cout)))
    return wp, shp


def _pack_dense(dp, dot_dtype):
    w = dp["w"].astype(jnp.float32)
    b = dp["b"].reshape(-1).astype(jnp.float32)
    scale = dp["scale"].reshape(-1).astype(jnp.float32)
    shift = dp["shift"].reshape(-1).astype(jnp.float32)
    din, dout = w.shape
    din_p, dout_p = _round_up(din, LANES), _round_up(dout, LANES)
    wp = jnp.pad(w * scale[None, :], ((0, din_p - din), (0, dout_p - dout))).astype(dot_dtype)
    shp = jnp.pad((b * scale + shift)[None, :], ((0, 0), (0, dout_p - dout)))
    return wp, shp


# ----------------------------------------------------------------------------
# Pallas kernel: bt samples per program (convs -> max-pool -> MLP -> L2 norm)
# ----------------------------------------------------------------------------
def _make_kernel(bt, l_pad, dilations, cin_pads, n_dense, final_valid, dot_dtype):
    n_conv = len(dilations)
    rows = bt * l_pad

    def kernel(x_ref, *refs):
        out_ref = refs[-1]
        p = refs[:-1]

        def mxu(a, w):
            # bf16 (v6e/v7x) or f32 operands, always f32 accumulation on the MXU
            return jnp.dot(a.astype(dot_dtype), w,
                           preferred_element_type=jnp.float32)

        # ---- conv layer 0: taps pre-packed in the wrapper -> one dot --------
        h = jnp.maximum(mxu(x_ref[...], p[0][...]) + p[1][...], 0.0)

        idx = 2
        # ---- remaining conv layers: folded BN(eval) + ReLU -------------------
        # Taps come from circular row rotations of the flattened (bt*l_pad, C)
        # buffer via pltpu.roll (XLU).  Wrapped / cross-sample rows only land in
        # time positions >= final_valid, which the masked max-pool never reads.
        for li in range(1, n_conv):
            w_ref, sh_ref = p[idx], p[idx + 1]
            idx += 2
            d = dilations[li]
            c = cin_pads[li]
            h_d = pltpu.roll(h, shift=rows - d, axis=0)       # h[t +  d]
            h_2d = pltpu.roll(h_d, shift=rows - d, axis=0)    # h[t + 2d]
            acc = mxu(h, w_ref[0:c, :])
            acc = acc + mxu(h_d, w_ref[c:2 * c, :])
            acc = acc + mxu(h_2d, w_ref[2 * c:3 * c, :])
            h = jnp.maximum(acc + sh_ref[...], 0.0)

        # ---- per-sample max over the valid time window (vectorized) ----------
        c_out = h.shape[1]
        h3 = h.reshape(bt, l_pad, c_out)                      # l_pad % 8 == 0
        t_idx = jax.lax.broadcasted_iota(jnp.int32, h3.shape, 1)
        # post-ReLU values are >= 0, so masking invalid rows with 0.0 is exact
        m = jnp.max(jnp.where(t_idx < final_valid, h3, 0.0), axis=1)  # (bt, C)

        # ---- dim_reduce: Linear + folded BN(eval) + Dropout(identity) + ReLU -
        for _ in range(n_dense):
            w_ref, sh_ref = p[idx], p[idx + 1]
            idx += 2
            m = jnp.maximum(mxu(m, w_ref[...]) + sh_ref[...], 0.0)

        # ---- final_forward + row-wise L2 normalization (rsqrt on the EUP) ----
        wf_ref, bf_ref = p[idx], p[idx + 1]
        out = mxu(m, wf_ref[...]) + bf_ref[...]
        inv = jax.lax.rsqrt(jnp.sum(out * out, axis=1, keepdims=True) + 1e-12)
        out_ref[...] = out * inv

    return kernel


def metric_learner_forward(x, conv_params, dense_params, final_params, *,
                           block_b=128, dot_dtype=jnp.float32):
    """x: (B, L, in_dim) float32  ->  (B, emb_dim) L2-normalized embeddings."""
    B, L, c_in = x.shape
    emb_dim = final_params[0].shape[1]
    dilations = tuple(int(cp["dilation"]) for cp in conv_params)
    cin_pads = tuple(_round_up(int(cp["w"].shape[1]), LANES) for cp in conv_params)
    final_valid = L - 2 * sum(dilations)
    if final_valid < 1:
        raise ValueError("sequence too short for the conv stack")

    dot_dtype = jnp.dtype(dot_dtype)
    itemsize = dot_dtype.itemsize
    row_align = 16 if itemsize == 2 else 8        # bf16 sublane packing
    l_pad = _round_up(L, row_align)
    # Invariant the circular tap shifts + final-valid mask rely on: every
    # output time position t < final_valid has its whole receptive field inside
    # the same sample's real rows (no wraparound / cross-sample reads).
    assert l_pad >= L and final_valid >= 1

    # --- batch tile --------------------------------------------------------
    # Multiple of 8 (aligned (bt, C) blocks & MXU M-fill), at most one tile of
    # batch padding, and >= 2 "parallel" grid steps when B > 8 so both v7x
    # TensorCores get work.
    blk = max(8, (int(block_b) // 8) * 8)
    bt = min(blk, _round_up(B, 8))
    if B > 8:
        bt = min(bt, _round_up((B + 1) // 2, 8))
    b_pad = _round_up(B, bt)
    rows = bt * l_pad

    # --- input: pre-pack the 3 taps of layer 0, pad, flatten, cast -----------
    c0_p = _round_up(3 * c_in, LANES)
    xp = jnp.pad(x.astype(jnp.float32),
                 ((0, b_pad - B), (0, l_pad - L), (0, 0)))    # (b_pad, l_pad, c_in)
    taps = [xp]
    for k in (1, 2):                                          # tap k = x[:, t+k, :]
        taps.append(jnp.pad(xp[:, k:, :], ((0, 0), (0, k), (0, 0))))
    x_tap = jnp.concatenate(taps, axis=-1)                    # (b_pad, l_pad, 3*c_in)
    x_tap = jnp.pad(x_tap, ((0, 0), (0, 0), (0, c0_p - 3 * c_in)))
    x_flat = x_tap.reshape(b_pad * l_pad, c0_p).astype(dot_dtype)

    # --- packed / folded parameters ------------------------------------------
    flat_params = []
    param_specs = []

    def add(arr):
        flat_params.append(arr)
        param_specs.append(pl.BlockSpec(arr.shape, lambda i: (0, 0)))

    w0, s0 = _pack_conv0(conv_params[0], dot_dtype)
    add(w0), add(s0)
    for cp in conv_params[1:]:
        wp, shp = _pack_conv(cp, dot_dtype)
        add(wp), add(shp)
    for dp in dense_params:
        wp, shp = _pack_dense(dp, dot_dtype)
        add(wp), add(shp)

    wf, bf = final_params
    fin, fout = wf.shape
    fin_p, fout_p = _round_up(fin, LANES), _round_up(fout, LANES)
    add(jnp.pad(wf.astype(jnp.float32),
                ((0, fin_p - fin), (0, fout_p - fout))).astype(dot_dtype))
    add(jnp.pad(bf.reshape(1, -1).astype(jnp.float32), ((0, 0), (0, fout_p - fout))))

    # --- VMEM budget (review: raise above v5e's 16 MiB default scoped limit,
    # stay under v7x's 64 MiB physical) ---------------------------------------
    chan_pads = [c0_p, fin_p, fout_p]
    chan_pads += [_round_up(int(cp["w"].shape[2]), LANES) for cp in conv_params]
    chan_pads += [_round_up(int(d), LANES) for dp in dense_params for d in dp["w"].shape]
    cmax_p = max(chan_pads)
    w_bytes = sum(int(a.size) * a.dtype.itemsize for a in flat_params)
    est = (2 * rows * c0_p * itemsize          # double-buffered input block
           + 2 * bt * fout_p * 4               # double-buffered output block
           + 2 * w_bytes                       # double-buffered grid-invariant params
           + 6 * rows * cmax_p * 4)            # h + 2 rolled taps + acc + slack
    vmem_limit = int(min(max(2 * est, 32 << 20), 64 << 20))

    kernel = _make_kernel(bt, l_pad, dilations, cin_pads, len(dense_params),
                          final_valid, dot_dtype)

    out = pl.pallas_call(
        kernel,
        out_shape=jax.ShapeDtypeStruct((b_pad, fout_p), jnp.float32),
        grid=(b_pad // bt,),
        in_specs=[pl.BlockSpec((rows, c0_p), lambda i: (i, 0))] + param_specs,
        out_specs=pl.BlockSpec((bt, fout_p), lambda i: (i, 0)),
        compiler_params=pltpu.CompilerParams(
            dimension_semantics=("parallel",),
            vmem_limit_bytes=vmem_limit),
    )(x_flat, *flat_params)
    return out[:B, :emb_dim]


# ----------------------------------------------------------------------------
# Pure-JAX reference (same math, unpadded params) for correctness checking
# ----------------------------------------------------------------------------
def reference_forward(x, conv_params, dense_params, final_params):
    h = x.astype(jnp.float32)                             # (B, L, C)
    for cp in conv_params:
        d = cp["dilation"]
        out_len = h.shape[1] - 2 * d
        acc = (jnp.einsum("blc,cd->bld", h[:, 0:out_len], cp["w"][0])
               + jnp.einsum("blc,cd->bld", h[:, d:d + out_len], cp["w"][1])
               + jnp.einsum("blc,cd->bld", h[:, 2 * d:2 * d + out_len], cp["w"][2]))
        acc = acc + cp["b"][None]
        acc = acc * cp["scale"][None] + cp["shift"][None]
        h = jnp.maximum(acc, 0.0)
    m = jnp.max(h, axis=1)                                # (B, C)
    for dp in dense_params:
        m = jnp.maximum((m @ dp["w"] + dp["b"]) * dp["scale"] + dp["shift"], 0.0)
    wf, bf = final_params
    out = m @ wf + bf
    return out / jnp.linalg.norm(out, axis=1, keepdims=True)


if __name__ == "__main__":
    key = jax.random.PRNGKey(0)
    kx, kp = jax.random.split(key)

    # small shapes: in_dim=4 -> next_dim=8, base_out_dim=16; emb_dim=8
    in_dim, emb_dim = 4, 8
    B, L = 2, 16
    x = jax.random.normal(kx, (B, L, in_dim), jnp.float32)

    # default configuration: num_dilations = 0
    conv_p, dense_p, final_p = init_params(kp, in_dim, emb_dim, num_dilations=0)
    out = jax.block_until_ready(metric_learner_forward(x, conv_p, dense_p, final_p))
    ref = reference_forward(x, conv_p, dense_p, final_p)
    np.testing.assert_allclose(np.asarray(out), np.asarray(ref),
                               atol=2e-5, rtol=2e-5)

    # generic path: one dilation block + one dim_reduce layer
    conv_p1, dense_p1, final_p1 = init_params(kp, in_dim, emb_dim, num_dilations=1)
    out1 = jax.block_until_ready(metric_learner_forward(x, conv_p1, dense_p1, final_p1))
    ref1 = reference_forward(x, conv_p1, dense_p1, final_p1)
    np.testing.assert_allclose(np.asarray(out1), np.asarray(ref1),
                               atol=2e-5, rtol=2e-5)

    # bf16 MXU path (v6e/v7x suggestion): f32 accumulation, looser tolerance
    out_bf = jax.block_until_ready(
        metric_learner_forward(x, conv_p1, dense_p1, final_p1,
                               dot_dtype=jnp.bfloat16))
    np.testing.assert_allclose(np.asarray(out_bf), np.asarray(ref1),
                               atol=5e-2, rtol=5e-2)

    print("KERNEL_OK")
</pallas_src>

<mosaic_0001>
module attributes {stable_mosaic.version = 11 : i64} {
  func.func @kernel(%arg0: i32, %arg1: memref<128x128xf32, #tpu.memory_space<vmem>>, %arg2: memref<128x128xf32, #tpu.memory_space<vmem>>, %arg3: memref<1x128xf32, #tpu.memory_space<vmem>>, %arg4: memref<384x128xf32, #tpu.memory_space<vmem>>, %arg5: memref<1x128xf32, #tpu.memory_space<vmem>>, %arg6: memref<128x128xf32, #tpu.memory_space<vmem>>, %arg7: memref<1x128xf32, #tpu.memory_space<vmem>>, %arg8: memref<8x128xf32, #tpu.memory_space<vmem>>) attributes {dimension_semantics = [#tpu.dimension_semantics<parallel>], iteration_bounds = array<i64: 1>, scalar_prefetch = 0 : i64, scratch_operands = 0 : i64, tpu.core_type = #tpu.core_type<tc>, window_params = [{transform_indices = @transform_0, window_bounds = array<i64: 128, 128>}, {pipeline_mode = #tpu.pipeline_mode<synchronous>, transform_indices = @transform_1, window_bounds = array<i64: 128, 128>}, {pipeline_mode = #tpu.pipeline_mode<synchronous>, transform_indices = @transform_2, window_bounds = array<i64: 1, 128>}, {pipeline_mode = #tpu.pipeline_mode<synchronous>, transform_indices = @transform_3, window_bounds = array<i64: 384, 128>}, {pipeline_mode = #tpu.pipeline_mode<synchronous>, transform_indices = @transform_4, window_bounds = array<i64: 1, 128>}, {pipeline_mode = #tpu.pipeline_mode<synchronous>, transform_indices = @transform_5, window_bounds = array<i64: 128, 128>}, {pipeline_mode = #tpu.pipeline_mode<synchronous>, transform_indices = @transform_6, window_bounds = array<i64: 1, 128>}, {transform_indices = @transform_7, window_bounds = array<i64: 8, 128>}]} {
    %c0 = arith.constant 0 : index
    %c0_0 = arith.constant 0 : index
    %0 = vector.load %arg1[%c0, %c0_0] : memref<128x128xf32, #tpu.memory_space<vmem>>, vector<128x128xf32>
    %c0_1 = arith.constant 0 : index
    %c0_2 = arith.constant 0 : index
    %1 = vector.load %arg2[%c0_1, %c0_2] : memref<128x128xf32, #tpu.memory_space<vmem>>, vector<128x128xf32>
    %cst = arith.constant dense<0.000000e+00> : vector<128x128xf32>
    %2 = tpu.matmul %0, %1, %cst {dimension_numbers = #tpu.dot_dimension_numbers<[1], [0], [0], [1], [0, 0, 1, 1], [], []>} : vector<128x128xf32>, vector<128x128xf32>, vector<128x128xf32> -> vector<128x128xf32>
    %c0_3 = arith.constant 0 : index
    %c0_4 = arith.constant 0 : index
    %3 = vector.load %arg3[%c0_3, %c0_4] : memref<1x128xf32, #tpu.memory_space<vmem>>, vector<1x128xf32>
    %4 = vector.broadcast %3 : vector<1x128xf32> to vector<128x128xf32>
    %5 = arith.addf %2, %4 : vector<128x128xf32>
    %cst_5 = arith.constant 0.000000e+00 : f32
    %6 = vector.broadcast %cst_5 : f32 to vector<128x128xf32>
    %7 = arith.maximumf %5, %6 : vector<128x128xf32>
    %c127_i32 = arith.constant 127 : i32
    %8 = tpu.dynamic_rotate %7 by %c127_i32 dim 0 : vector<128x128xf32>, i32 -> vector<128x128xf32>
    %c127_i32_6 = arith.constant 127 : i32
    %9 = tpu.dynamic_rotate %8 by %c127_i32_6 dim 0 : vector<128x128xf32>, i32 -> vector<128x128xf32>
    %c0_7 = arith.constant 0 : index
    %c0_8 = arith.constant 0 : index
    %10 = vector.load %arg4[%c0_7, %c0_8] : memref<384x128xf32, #tpu.memory_space<vmem>>, vector<128x128xf32>
    %cst_9 = arith.constant dense<0.000000e+00> : vector<128x128xf32>
    %11 = tpu.matmul %7, %10, %cst_9 {dimension_numbers = #tpu.dot_dimension_numbers<[1], [0], [0], [1], [0, 0, 1, 1], [], []>} : vector<128x128xf32>, vector<128x128xf32>, vector<128x128xf32> -> vector<128x128xf32>
    %c128 = arith.constant 128 : index
    %c0_10 = arith.constant 0 : index
    %12 = vector.load %arg4[%c128, %c0_10] : memref<384x128xf32, #tpu.memory_space<vmem>>, vector<128x128xf32>
    %cst_11 = arith.constant dense<0.000000e+00> : vector<128x128xf32>
    %13 = tpu.matmul %8, %12, %cst_11 {dimension_numbers = #tpu.dot_dimension_numbers<[1], [0], [0], [1], [0, 0, 1, 1], [], []>} : vector<128x128xf32>, vector<128x128xf32>, vector<128x128xf32> -> vector<128x128xf32>
    %14 = arith.addf %11, %13 : vector<128x128xf32>
    %c256 = arith.constant 256 : index
    %c0_12 = arith.constant 0 : index
    %15 = vector.load %arg4[%c256, %c0_12] : memref<384x128xf32, #tpu.memory_space<vmem>>, vector<128x128xf32>
    %cst_13 = arith.constant dense<0.000000e+00> : vector<128x128xf32>
    %16 = tpu.matmul %9, %15, %cst_13 {dimension_numbers = #tpu.dot_dimension_numbers<[1], [0], [0], [1], [0, 0, 1, 1], [], []>} : vector<128x128xf32>, vector<128x128xf32>, vector<128x128xf32> -> vector<128x128xf32>
    %17 = arith.addf %14, %16 : vector<128x128xf32>
    %c0_14 = arith.constant 0 : index
    %c0_15 = arith.constant 0 : index
    %18 = vector.load %arg5[%c0_14, %c0_15] : memref<1x128xf32, #tpu.memory_space<vmem>>, vector<1x128xf32>
    %19 = vector.broadcast %18 : vector<1x128xf32> to vector<128x128xf32>
    %20 = arith.addf %17, %19 : vector<128x128xf32>
    %cst_16 = arith.constant 0.000000e+00 : f32
    %21 = vector.broadcast %cst_16 : f32 to vector<128x128xf32>
    %22 = arith.maximumf %20, %21 : vector<128x128xf32>
    %23 = vector.shape_cast %22 : vector<128x128xf32> to vector<8x16x128xf32>
    %24 = tpu.iota {dimensions = array<i32: 1>} : vector<8x16x128xi32>
    %c12_i32 = arith.constant 12 : i32
    %25 = vector.broadcast %c12_i32 : i32 to vector<8x16x128xi32>
    %26 = arith.cmpi slt, %24, %25 : vector<8x16x128xi32>
    %cst_17 = arith.constant 0.000000e+00 : f32
    %27 = vector.broadcast %cst_17 : f32 to vector<8x16x128xf32>
    %28 = arith.select %26, %23, %27 : vector<8x16x128xi1>, vector<8x16x128xf32>
    %cst_18 = arith.constant dense<0xFF800000> : vector<8x128xf32>
    %29 = vector.multi_reduction <maximumf>, %28, %cst_18 [1] : vector<8x16x128xf32> to vector<8x128xf32>
    %c0_19 = arith.constant 0 : index
    %c0_20 = arith.constant 0 : index
    %30 = vector.load %arg6[%c0_19, %c0_20] : memref<128x128xf32, #tpu.memory_space<vmem>>, vector<128x128xf32>
    %cst_21 = arith.constant dense<0.000000e+00> : vector<8x128xf32>
    %31 = tpu.matmul %29, %30, %cst_21 {dimension_numbers = #tpu.dot_dimension_numbers<[1], [0], [0], [1], [0, 0, 1, 1], [], []>} : vector<8x128xf32>, vector<128x128xf32>, vector<8x128xf32> -> vector<8x128xf32>
    %c0_22 = arith.constant 0 : index
    %c0_23 = arith.constant 0 : index
    %32 = vector.load %arg7[%c0_22, %c0_23] : memref<1x128xf32, #tpu.memory_space<vmem>>, vector<1x128xf32>
    %33 = vector.broadcast %32 : vector<1x128xf32> to vector<8x128xf32>
    %34 = arith.addf %31, %33 : vector<8x128xf32>
    %35 = arith.mulf %34, %34 : vector<8x128xf32>
    %cst_24 = arith.constant dense<0.000000e+00> : vector<8xf32>
    %36 = vector.multi_reduction <add>, %35, %cst_24 [1] : vector<8x128xf32> to vector<8xf32>
    %37 = vector.shape_cast %36 : vector<8xf32> to vector<8x1xf32>
    %cst_25 = arith.constant 9.99999996E-13 : f32
    %38 = vector.broadcast %cst_25 : f32 to vector<8x1xf32>
    %39 = arith.addf %37, %38 : vector<8x1xf32>
    %40 = math.rsqrt %39 : vector<8x1xf32>
    %41 = vector.broadcast %40 : vector<8x1xf32> to vector<8x128xf32>
    %42 = arith.mulf %34, %41 : vector<8x128xf32>
    %c0_26 = arith.constant 0 : index
    %c0_27 = arith.constant 0 : index
    %43 = vector.load %arg8[%c0_26, %c0_27] : memref<8x128xf32, #tpu.memory_space<vmem>>, vector<8x128xf32>
    tpu.vector_store %arg8[%c0_26, %c0_27], %42 {strides = array<i32>} : memref<8x128xf32, #tpu.memory_space<vmem>>, vector<8x128xf32>,
    return
  }
  func.func @transform_0(%arg0: i32) -> (i32, i32) {
    %c0_i32 = arith.constant 0 : i32
    %c0_i32_0 = arith.constant 0 : i32
    return %arg0, %c0_i32 : i32, i32
  }
  func.func @transform_1(%arg0: i32) -> (i32, i32) {
    %c0_i32 = arith.constant 0 : i32
    %c0_i32_0 = arith.constant 0 : i32
    %c0_i32_1 = arith.constant 0 : i32
    return %c0_i32, %c0_i32_0 : i32, i32
  }
  func.func @transform_2(%arg0: i32) -> (i32, i32) {
    %c0_i32 = arith.constant 0 : i32
    %c0_i32_0 = arith.constant 0 : i32
    %c0_i32_1 = arith.constant 0 : i32
    return %c0_i32, %c0_i32_0 : i32, i32
  }
  func.func @transform_3(%arg0: i32) -> (i32, i32) {
    %c0_i32 = arith.constant 0 : i32
    %c0_i32_0 = arith.constant 0 : i32
    %c0_i32_1 = arith.constant 0 : i32
    return %c0_i32, %c0_i32_0 : i32, i32
  }
  func.func @transform_4(%arg0: i32) -> (i32, i32) {
    %c0_i32 = arith.constant 0 : i32
    %c0_i32_0 = arith.constant 0 : i32
    %c0_i32_1 = arith.constant 0 : i32
    return %c0_i32, %c0_i32_0 : i32, i32
  }
  func.func @transform_5(%arg0: i32) -> (i32, i32) {
    %c0_i32 = arith.constant 0 : i32
    %c0_i32_0 = arith.constant 0 : i32
    %c0_i32_1 = arith.constant 0 : i32
    return %c0_i32, %c0_i32_0 : i32, i32
  }
  func.func @transform_6(%arg0: i32) -> (i32, i32) {
    %c0_i32 = arith.constant 0 : i32
    %c0_i32_0 = arith.constant 0 : i32
    %c0_i32_1 = arith.constant 0 : i32
    return %c0_i32, %c0_i32_0 : i32, i32
  }
  func.func @transform_7(%arg0: i32) -> (i32, i32) {
    %c0_i32 = arith.constant 0 : i32
    %c0_i32_0 = arith.constant 0 : i32
    return %arg0, %c0_i32 : i32, i32
  }
}

</mosaic_0001>

<llo_original>
// kernel: tpu_custom_call.1
$region0: #{tpu_custom_call.1}
  #allocation0 [shape = 'u32[]', space=smem, size = 0x4, offset = 0x4, fixed_abs, tag = 'smem constant byte address 0x4 - core index']
  #allocation1 [shape = 'u32[144,128]{1,0:T(1,128)}', space=vmem, size = 0x12000, scoped, tag = 'internal scratch']
  %s0 = inlined_call_operand.hbm [shape: f32[128,128], index: 0, kind: input, shape index: {}]
  %s1 = inlined_call_operand.hbm [shape: f32[128,128], index: 1, kind: input, shape index: {}]
  %s2 = inlined_call_operand.vmem [shape: f32[1,128], index: 2, kind: input, shape index: {}]
  %s3 = inlined_call_operand.hbm [shape: f32[384,128], index: 3, kind: input, shape index: {}]
  %s4 = inlined_call_operand.vmem [shape: f32[1,128], index: 4, kind: input, shape index: {}]
  %s5 = inlined_call_operand.hbm [shape: f32[128,128], index: 5, kind: input, shape index: {}]
  %s6 = inlined_call_operand.vmem [shape: f32[1,128], index: 6, kind: input, shape index: {}]
  %s7 = inlined_call_operand.hbm [shape: f32[8,128], index: 7, kind: output, shape index: {}]
  %s8 = sld [smem:[#allocation0]]
  $region54: #{tpu_custom_call.1} parent=0
    _
  %s10 = ssub.s32 1, %s8
  %s11 = scalar_select 0, %s10, %s8
  $region1: #{tpu_custom_call.1} parent=0
    #allocation2 [shape = 'u8[65536]{0}', space=vmem, size = 0x10000, scoped, tag = 'input window, operand 0, single buffered']
    #allocation3 [shape = 's32[1]{0}', space=sflag, size = 0x4, scoped, tag = 'scoped memory for tpu_custom_call.1']
    #allocation4 [shape = 's32[1]{0}', space=sflag, size = 0x4, scoped, tag = 'scoped memory for tpu_custom_call.1']
    #allocation5 [shape = 'u8[65536]{0}', space=vmem, size = 0x10000, scoped, tag = 'input window, operand 1, single buffered']
    #allocation6 [shape = 's32[1]{0}', space=sflag, size = 0x4, scoped, tag = 'scoped memory for tpu_custom_call.1']
    #allocation7 [shape = 'u8[196608]{0}', space=vmem, size = 0x30000, scoped, tag = 'input window, operand 3, single buffered']
    #allocation8 [shape = 'u8[65536]{0}', space=vmem, size = 0x10000, scoped, tag = 'input window, operand 5, single buffered']
    #allocation9 [shape = 's32[1]{0}', space=sflag, size = 0x4, scoped, tag = 'scoped memory for tpu_custom_call.1']
    #allocation10 [shape = 'u8[4096]{0}', space=vmem, size = 0x1000, scoped, tag = 'output window, operand 0, single buffered']
    %12 = vsyncpa [#allocation3], 0
    %13 = vsyncpa [#allocation6], 0
    %14 = vsyncpa [#allocation9], 0
    %15 = vsyncpa [#allocation4], 0
    // Predicated region
    $region2: #{tpu_custom_call.1} parent=1 // pred_check
      _
    $region3: #{tpu_custom_call.1} parent=1 // pred_check_branch
      %17 = sbr.rel (0) target = $region5
    $region4: #{tpu_custom_call.1} parent=1 // pred_region
      %s19 = ssub.s32 2048, 2048
      %20 = vsyncadd [#allocation3], %s19
      %s21 = sshll.u32 [#allocation2], 4
      %s22 = int_to_ptr.vmem [resolvable:$true] %s21
      %27 = dma.hbm_to_vmem [thread:$0]  %s0, 2048, %s22, [#allocation3], 128, 128, 8
    $region5: #{tpu_custom_call.1} parent=1 // pred_fallthru
      _
    // Predicated region
    $region6: #{tpu_custom_call.1} parent=1 // pred_check
      _
    $region7: #{tpu_custom_call.1} parent=1 // pred_check_branch
      %29 = sbr.rel (0) target = $region9
    $region8: #{tpu_custom_call.1} parent=1 // pred_region
      %s31 = ssub.s32 2048, 2048
      %32 = vsyncadd [#allocation6], %s31
      %s33 = sshll.u32 [#allocation5], 4
      %s34 = int_to_ptr.vmem [resolvable:$true] %s33
      %39 = dma.hbm_to_vmem [thread:$0]  %s1, 2048, %s34, [#allocation6], 128, 128, 8
    $region9: #{tpu_custom_call.1} parent=1 // pred_fallthru
      _
    // Predicated region
    $region10: #{tpu_custom_call.1} parent=1 // pred_check
      _
    $region11: #{tpu_custom_call.1} parent=1 // pred_check_branch
      %41 = sbr.rel (0) target = $region13
    $region12: #{tpu_custom_call.1} parent=1 // pred_region
      _
    $region13: #{tpu_custom_call.1} parent=1 // pred_fallthru
      _
    // Predicated region
    $region14: #{tpu_custom_call.1} parent=1 // pred_check
      _
    $region15: #{tpu_custom_call.1} parent=1 // pred_check_branch
      %43 = sbr.rel (0) target = $region17
    $region16: #{tpu_custom_call.1} parent=1 // pred_region
      %s45 = ssub.s32 6144, 6144
      %46 = vsyncadd [#allocation6], %s45
      %s47 = sshll.u32 [#allocation7], 4
      %s48 = int_to_ptr.vmem [resolvable:$true] %s47
      %53 = dma.hbm_to_vmem [thread:$0]  %s3, 6144, %s48, [#allocation6], 128, 128, 8
    $region17: #{tpu_custom_call.1} parent=1 // pred_fallthru
      _
    // Predicated region
    $region18: #{tpu_custom_call.1} parent=1 // pred_check
      _
    $region19: #{tpu_custom_call.1} parent=1 // pred_check_branch
      %55 = sbr.rel (0) target = $region21
    $region20: #{tpu_custom_call.1} parent=1 // pred_region
      _
    $region21: #{tpu_custom_call.1} parent=1 // pred_fallthru
      _
    // Predicated region
    $region22: #{tpu_custom_call.1} parent=1 // pred_check
      _
    $region23: #{tpu_custom_call.1} parent=1 // pred_check_branch
      %57 = sbr.rel (0) target = $region25
    $region24: #{tpu_custom_call.1} parent=1 // pred_region
      %s59 = ssub.s32 2048, 2048
      %60 = vsyncadd [#allocation9], %s59
      %s61 = sshll.u32 [#allocation8], 4
      %s62 = int_to_ptr.vmem [resolvable:$true] %s61
      %67 = dma.hbm_to_vmem [thread:$0]  %s5, 2048, %s62, [#allocation9], 128, 128, 8
    $region25: #{tpu_custom_call.1} parent=1 // pred_fallthru
      _
    // Predicated region
    $region26: #{tpu_custom_call.1} parent=1 // pred_check
      _
    $region27: #{tpu_custom_call.1} parent=1 // pred_check_branch
      %69 = sbr.rel (0) target = $region29
    $region28: #{tpu_custom_call.1} parent=1 // pred_region
      _
    $region29: #{tpu_custom_call.1} parent=1 // pred_fallthru
      _
    // Predicated region
    $region30: #{tpu_custom_call.1} parent=1 // pred_check
      _
    $region31: #{tpu_custom_call.1} parent=1 // pred_check_branch
      %71 = sbr.rel (0) target = $region33
    $region32: #{tpu_custom_call.1} parent=1 // pred_region
      %72 = dma.done [#allocation3], 2048
    $region33: #{tpu_custom_call.1} parent=1 // pred_fallthru
      _
    // Predicated region
    $region34: #{tpu_custom_call.1} parent=1 // pred_check
      _
    $region35: #{tpu_custom_call.1} parent=1 // pred_check_branch
      %74 = sbr.rel (0) target = $region37
    $region36: #{tpu_custom_call.1} parent=1 // pred_region
      %75 = dma.done [#allocation6], 2048
    $region37: #{tpu_custom_call.1} parent=1 // pred_fallthru
      _
    // Predicated region
    $region38: #{tpu_custom_call.1} parent=1 // pred_check
      _
    $region39: #{tpu_custom_call.1} parent=1 // pred_check_branch
      %77 = sbr.rel (0) target = $region41
    $region40: #{tpu_custom_call.1} parent=1 // pred_region
      %78 = dma.done [#allocation6], 6144
    $region41: #{tpu_custom_call.1} parent=1 // pred_fallthru
      _
    // Predicated region
    $region42: #{tpu_custom_call.1} parent=1 // pred_check
      _
    $region43: #{tpu_custom_call.1} parent=1 // pred_check_branch
      %80 = sbr.rel (0) target = $region45
    $region44: #{tpu_custom_call.1} parent=1 // pred_region
      %81 = dma.done [#allocation9], 2048
    $region45: #{tpu_custom_call.1} parent=1 // pred_fallthru
      _
    %v82 = vld [vmem:[#allocation2] sm:$0xff]
    %v83 = vld [vmem:[#allocation2 + $0x8] sm:$0xff]
    %v84 = vld [vmem:[#allocation2 + $0x10] sm:$0xff]
    %v85 = vld [vmem:[#allocation2 + $0x18] sm:$0xff]
    %v86 = vld [vmem:[#allocation2 + $0x20] sm:$0xff]
    %v87 = vld [vmem:[#allocation2 + $0x28] sm:$0xff]
    %v88 = vld [vmem:[#allocation2 + $0x30] sm:$0xff]
    %v89 = vld [vmem:[#allocation2 + $0x38] sm:$0xff]
    %v90 = vld [vmem:[#allocation2 + $0x40] sm:$0xff]
    %v91 = vld [vmem:[#allocation2 + $0x48] sm:$0xff]
    %v92 = vld [vmem:[#allocation2 + $0x50] sm:$0xff]
    %v93 = vld [vmem:[#allocation2 + $0x58] sm:$0xff]
    %v94 = vld [vmem:[#allocation2 + $0x60] sm:$0xff]
    %v95 = vld [vmem:[#allocation2 + $0x68] sm:$0xff]
    %v96 = vld [vmem:[#allocation2 + $0x70] sm:$0xff]
    %v97 = vld [vmem:[#allocation2 + $0x78] sm:$0xff]
    %v98 = vld [vmem:[#allocation5] sm:$0xff]
    %v99 = vld [vmem:[#allocation5 + $0x8] sm:$0xff]
    %v100 = vld [vmem:[#allocation5 + $0x10] sm:$0xff]
    %v101 = vld [vmem:[#allocation5 + $0x18] sm:$0xff]
    %v102 = vld [vmem:[#allocation5 + $0x20] sm:$0xff]
    %v103 = vld [vmem:[#allocation5 + $0x28] sm:$0xff]
    %v104 = vld [vmem:[#allocation5 + $0x30] sm:$0xff]
    %v105 = vld [vmem:[#allocation5 + $0x38] sm:$0xff]
    %v106 = vld [vmem:[#allocation5 + $0x40] sm:$0xff]
    %v107 = vld [vmem:[#allocation5 + $0x48] sm:$0xff]
    %v108 = vld [vmem:[#allocation5 + $0x50] sm:$0xff]
    %v109 = vld [vmem:[#allocation5 + $0x58] sm:$0xff]
    %v110 = vld [vmem:[#allocation5 + $0x60] sm:$0xff]
    %v111 = vld [vmem:[#allocation5 + $0x68] sm:$0xff]
    %v112 = vld [vmem:[#allocation5 + $0x70] sm:$0xff]
    %v113 = vld [vmem:[#allocation5 + $0x78] sm:$0xff]
    %v114 = vld [vmem:[%s2] sm:$0x1]
    %v116 = vlaneseq
    %v117 = vshrl.u32 %v116, 7
    %v118 = vsub.s32 0, %v117
    %v119 = vrot.slane %v114, %v118
    %121 = vmatprep.subr.mxu0 0.0
    %122 = vmatpush1.msra.mxu0 %v98
    %123 = vmatprep.subr.mxu0 0.0
    %124 = vmatpush1.msra.mxu0 %v99
    %125 = vmatprep.subr.mxu0 0.0
    %126 = vmatpush1.msra.mxu0 %v100
    %127 = vmatprep.subr.mxu0 0.0
    %128 = vmatpush1.msra.mxu0 %v101
    %129 = vmatprep.subr.mxu0 0.0
    %130 = vmatpush1.msra.mxu0 %v102
    %131 = vmatprep.subr.mxu0 0.0
    %132 = vmatpush1.msra.mxu0 %v103
    %133 = vmatprep.subr.mxu0 0.0
    %134 = vmatpush1.msra.mxu0 %v104
    %135 = vmatprep.subr.mxu0 0.0
    %136 = vmatpush1.msra.mxu0 %v105
    %137 = vmatprep.subr.mxu0 0.0
    %138 = vmatpush1.msra.mxu0 %v106
    %139 = vmatprep.subr.mxu0 0.0
    %140 = vmatpush1.msra.mxu0 %v107
    %141 = vmatprep.subr.mxu0 0.0
    %142 = vmatpush1.msra.mxu0 %v108
    %143 = vmatprep.subr.mxu0 0.0
    %144 = vmatpush1.msra.mxu0 %v109
    %145 = vmatprep.subr.mxu0 0.0
    %146 = vmatpush1.msra.mxu0 %v110
    %147 = vmatprep.subr.mxu0 0.0
    %148 = vmatpush1.msra.mxu0 %v111
    %149 = vmatprep.subr.mxu0 0.0
    %150 = vmatpush1.msra.mxu0 %v112
    %151 = vmatprep.subr.mxu0 0.0
    %152 = vmatpush1.msra.mxu0 %v113
    %153 = vmatprep.subr.mxu0 0.0
    %154 = vmatpush1.msra.mxu0 0.0
    %155 = vmatprep.subr.mxu0 0.0
    %156 = vmatpush1.msra.mxu0 0.0
    %157 = vmatprep.subr.mxu0 0.0
    %158 = vmatpush1.msra.mxu0 0.0
    %159 = vmatprep.subr.mxu0 0.0
    %160 = vmatpush1.msra.mxu0 0.0
    %161 = vmatprep.subr.mxu0 0.0
    %162 = vmatpush1.msra.mxu0 0.0
    %163 = vmatprep.subr.mxu0 0.0
    %164 = vmatpush1.msra.mxu0 0.0
    %165 = vmatprep.subr.mxu0 0.0
    %166 = vmatpush1.msra.mxu0 0.0
    %167 = vmatprep.subr.mxu0 0.0
    %168 = vmatpush1.msra.mxu0 0.0
    %169 = vmatprep.subr.mxu0 0.0
    %170 = vmatpush1.msra.mxu0 0.0
    %171 = vmatprep.subr.mxu0 0.0
    %172 = vmatpush1.msra.mxu0 0.0
    %173 = vmatprep.subr.mxu0 0.0
    %174 = vmatpush1.msra.mxu0 0.0
    %175 = vmatprep.subr.mxu0 0.0
    %176 = vmatpush1.msra.mxu0 0.0
    %177 = vmatprep.subr.mxu0 0.0
    %178 = vmatpush1.msra.mxu0 0.0
    %179 = vmatprep.subr.mxu0 0.0
    %180 = vmatpush1.msra.mxu0 0.0
    %181 = vmatprep.subr.mxu0 0.0
    %182 = vmatpush1.msra.mxu0 0.0
    %183 = vmatprep.subr.mxu0 0.0
    %184 = vmatpush1.msra.mxu0 0.0
    %185 = vmatprep.mubr.f32.mxu0 0.0
    %186 = vmatmul.mubr.f32.gmra.mrb[0].mxu0 %v82
    %v187 = vpop.f32.mrb[0].mxu0
    %v188 = vadd.f32 %v119, %v187
    %v189 = vpop.f32.mrb[0].mxu0
    %190 = vmatprep.mubr.f32.mxu0 0.0
    %191 = vmatmul.mubr.f32.gmra.mrb[0].mxu0 %v83
    %v192 = vpop.f32.mrb[0].mxu0
    %v193 = vadd.f32 %v119, %v192
    %v194 = vpop.f32.mrb[0].mxu0
    %195 = vmatprep.mubr.f32.mxu0 0.0
    %196 = vmatmul.mubr.f32.gmra.mrb[0].mxu0 %v84
    %v197 = vpop.f32.mrb[0].mxu0
    %v198 = vadd.f32 %v119, %v197
    %v199 = vpop.f32.mrb[0].mxu0
    %200 = vmatprep.mubr.f32.mxu0 0.0
    %201 = vmatmul.mubr.f32.gmra.mrb[0].mxu0 %v85
    %v202 = vpop.f32.mrb[0].mxu0
    %v203 = vadd.f32 %v119, %v202
    %v204 = vpop.f32.mrb[0].mxu0
    %205 = vmatprep.mubr.f32.mxu0 0.0
    %206 = vmatmul.mubr.f32.gmra.mrb[0].mxu0 %v86
    %v207 = vpop.f32.mrb[0].mxu0
    %v208 = vadd.f32 %v119, %v207
    %v209 = vpop.f32.mrb[0].mxu0
    %210 = vmatprep.mubr.f32.mxu0 0.0
    %211 = vmatmul.mubr.f32.gmra.mrb[0].mxu0 %v87
    %v212 = vpop.f32.mrb[0].mxu0
    %v213 = vadd.f32 %v119, %v212
    %v214 = vpop.f32.mrb[0].mxu0
    %215 = vmatprep.mubr.f32.mxu0 0.0
    %216 = vmatmul.mubr.f32.gmra.mrb[0].mxu0 %v88
    %v217 = vpop.f32.mrb[0].mxu0
    %v218 = vadd.f32 %v119, %v217
    %v219 = vpop.f32.mrb[0].mxu0
    %220 = vmatprep.mubr.f32.mxu0 0.0
    %221 = vmatmul.mubr.f32.gmra.mrb[0].mxu0 %v89
    %v222 = vpop.f32.mrb[0].mxu0
    %v223 = vadd.f32 %v119, %v222
    %v224 = vpop.f32.mrb[0].mxu0
    %225 = vmatprep.mubr.f32.mxu0 0.0
    %226 = vmatmul.mubr.f32.gmra.mrb[0].mxu0 %v90
    %v227 = vpop.f32.mrb[0].mxu0
    %v228 = vadd.f32 %v119, %v227
    %v229 = vpop.f32.mrb[0].mxu0
    %230 = vmatprep.mubr.f32.mxu0 0.0
    %231 = vmatmul.mubr.f32.gmra.mrb[0].mxu0 %v91
    %v232 = vpop.f32.mrb[0].mxu0
    %v233 = vadd.f32 %v119, %v232
    %v234 = vpop.f32.mrb[0].mxu0
    %235 = vmatprep.mubr.f32.mxu0 0.0
    %236 = vmatmul.mubr.f32.gmra.mrb[0].mxu0 %v92
    %v237 = vpop.f32.mrb[0].mxu0
    %v238 = vadd.f32 %v119, %v237
    %v239 = vpop.f32.mrb[0].mxu0
    %240 = vmatprep.mubr.f32.mxu0 0.0
    %241 = vmatmul.mubr.f32.gmra.mrb[0].mxu0 %v93
    %v242 = vpop.f32.mrb[0].mxu0
    %v243 = vadd.f32 %v119, %v242
    %v244 = vpop.f32.mrb[0].mxu0
    %245 = vmatprep.mubr.f32.mxu0 0.0
    %246 = vmatmul.mubr.f32.gmra.mrb[0].mxu0 %v94
    %v247 = vpop.f32.mrb[0].mxu0
    %v248 = vadd.f32 %v119, %v247
    %v249 = vpop.f32.mrb[0].mxu0
    %250 = vmatprep.mubr.f32.mxu0 0.0
    %251 = vmatmul.mubr.f32.gmra.mrb[0].mxu0 %v95
    %v252 = vpop.f32.mrb[0].mxu0
    %v253 = vadd.f32 %v119, %v252
    %v254 = vpop.f32.mrb[0].mxu0
    %255 = vmatprep.mubr.f32.mxu0 0.0
    %256 = vmatmul.mubr.f32.gmra.mrb[0].mxu0 %v96
    %v257 = vpop.f32.mrb[0].mxu0
    %v258 = vadd.f32 %v119, %v257
    %v259 = vpop.f32.mrb[0].mxu0
    %260 = vmatprep.mubr.f32.mxu0 0.0
    %261 = vmatmul.mubr.f32.gmra.mrb[0].mxu0 %v97
    %v262 = vpop.f32.mrb[0].mxu0
    %v263 = vadd.f32 %v119, %v262
    %v264 = vpop.f32.mrb[0].mxu0
    %265 = vdwg.mxu0
    %v266 = vmax.f32 %v188, 0.0
    %v267 = vmax.f32 %v193, 0.0
    %v268 = vmax.f32 %v198, 0.0
    %v269 = vmax.f32 %v203, 0.0
    %v270 = vmax.f32 %v208, 0.0
    %v271 = vmax.f32 %v213, 0.0
    %v272 = vmax.f32 %v218, 0.0
    %v273 = vmax.f32 %v223, 0.0
    %v274 = vmax.f32 %v228, 0.0
    %v275 = vmax.f32 %v233, 0.0
    %v276 = vmax.f32 %v238, 0.0
    %v277 = vmax.f32 %v243, 0.0
    %v278 = vmax.f32 %v248, 0.0
    %v279 = vmax.f32 %v253, 0.0
    %v280 = vmax.f32 %v258, 0.0
    %v281 = vmax.f32 %v263, 0.0
    %v282 = vrot.slane %v266, 1
    %v283 = vrot.slane %v267, 1
    %v284 = vrot.slane %v268, 1
    %v285 = vrot.slane %v269, 1
    %v286 = vrot.slane %v270, 1
    %v287 = vrot.slane %v271, 1
    %v288 = vrot.slane %v272, 1
    %v289 = vrot.slane %v273, 1
    %v290 = vrot.slane %v274, 1
    %v291 = vrot.slane %v275, 1
    %v292 = vrot.slane %v276, 1
    %v293 = vrot.slane %v277, 1
    %v294 = vrot.slane %v278, 1
    %v295 = vrot.slane %v279, 1
    %v296 = vrot.slane %v280, 1
    %v297 = vrot.slane %v281, 1
    %v298 = vlaneseq
    %v299 = vshrl.u32 %v298, 7
    %vm300 = vcmp.lt.s32.totalorder %v299, 7
    %v301 = vsel %vm300, %v296, %v297
    %v302 = vsel %vm300, %v295, %v296
    %v303 = vsel %vm300, %v294, %v295
    %v304 = vsel %vm300, %v293, %v294
    %v305 = vsel %vm300, %v292, %v293
    %v306 = vsel %vm300, %v291, %v292
    %v307 = vsel %vm300, %v290, %v291
    %v308 = vsel %vm300, %v289, %v290
    %v309 = vsel %vm300, %v288, %v289
    %v310 = vsel %vm300, %v287, %v288
    %v311 = vsel %vm300, %v286, %v287
    %v312 = vsel %vm300, %v285, %v286
    %v313 = vsel %vm300, %v284, %v285
    %v314 = vsel %vm300, %v283, %v284
    %v315 = vsel %vm300, %v282, %v283
    %v316 = vsel %vm300, %v297, %v282
    %v317 = vrot.slane %v315, 1
    %v318 = vrot.slane %v314, 1
    %v319 = vrot.slane %v313, 1
    %v320 = vrot.slane %v312, 1
    %v321 = vrot.slane %v311, 1
    %v322 = vrot.slane %v310, 1
    %v323 = vrot.slane %v309, 1
    %v324 = vrot.slane %v308, 1
    %v325 = vrot.slane %v307, 1
    %v326 = vrot.slane %v306, 1
    %v327 = vrot.slane %v305, 1
    %v328 = vrot.slane %v304, 1
    %v329 = vrot.slane %v303, 1
    %v330 = vrot.slane %v302, 1
    %v331 = vrot.slane %v301, 1
    %v332 = vrot.slane %v316, 1
    %v333 = vsel %vm300, %v331, %v332
    %v334 = vsel %vm300, %v330, %v331
    %v335 = vsel %vm300, %v329, %v330
    %v336 = vsel %vm300, %v328, %v329
    %v337 = vsel %vm300, %v327, %v328
    %v338 = vsel %vm300, %v326, %v327
    %v339 = vsel %vm300, %v325, %v326
    %v340 = vsel %vm300, %v324, %v325
    %v341 = vsel %vm300, %v323, %v324
    %v342 = vsel %vm300, %v322, %v323
    %v343 = vsel %vm300, %v321, %v322
    %v344 = vsel %vm300, %v320, %v321
    %v345 = vsel %vm300, %v319, %v320
    %v346 = vsel %vm300, %v318, %v319
    %v347 = vsel %vm300, %v317, %v318
    %v348 = vsel %vm300, %v332, %v317
    %v349 = vld [vmem:[#allocation7] sm:$0xff]
    %v350 = vld [vmem:[#allocation7 + $0x8] sm:$0xff]
    %v351 = vld [vmem:[#allocation7 + $0x10] sm:$0xff]
    %v352 = vld [vmem:[#allocation7 + $0x18] sm:$0xff]
    %v353 = vld [vmem:[#allocation7 + $0x20] sm:$0xff]
    %v354 = vld [vmem:[#allocation7 + $0x28] sm:$0xff]
    %v355 = vld [vmem:[#allocation7 + $0x30] sm:$0xff]
    %v356 = vld [vmem:[#allocation7 + $0x38] sm:$0xff]
    %v357 = vld [vmem:[#allocation7 + $0x40] sm:$0xff]
    %v358 = vld [vmem:[#allocation7 + $0x48] sm:$0xff]
    %v359 = vld [vmem:[#allocation7 + $0x50] sm:$0xff]
    %v360 = vld [vmem:[#allocation7 + $0x58] sm:$0xff]
    %v361 = vld [vmem:[#allocation7 + $0x60] sm:$0xff]
    %v362 = vld [vmem:[#allocation7 + $0x68] sm:$0xff]
    %v363 = vld [vmem:[#allocation7 + $0x70] sm:$0xff]
    %v364 = vld [vmem:[#allocation7 + $0x78] sm:$0xff]
    %v365 = vld [vmem:[#allocation7 + $0x80] sm:$0xff]
    %v366 = vld [vmem:[#allocation7 + $0x88] sm:$0xff]
    %v367 = vld [vmem:[#allocation7 + $0x90] sm:$0xff]
    %v368 = vld [vmem:[#allocation7 + $0x98] sm:$0xff]
    %v369 = vld [vmem:[#allocation7 + $0xa0] sm:$0xff]
    %v370 = vld [vmem:[#allocation7 + $0xa8] sm:$0xff]
    %v371 = vld [vmem:[#allocation7 + $0xb0] sm:$0xff]
    %v372 = vld [vmem:[#allocation7 + $0xb8] sm:$0xff]
    %v373 = vld [vmem:[#allocation7 + $0xc0] sm:$0xff]
    %v374 = vld [vmem:[#allocation7 + $0xc8] sm:$0xff]
    %v375 = vld [vmem:[#allocation7 + $0xd0] sm:$0xff]
    %v376 = vld [vmem:[#allocation7 + $0xd8] sm:$0xff]
    %v377 = vld [vmem:[#allocation7 + $0xe0] sm:$0xff]
    %v378 = vld [vmem:[#allocation7 + $0xe8] sm:$0xff]
    %v379 = vld [vmem:[#allocation7 + $0xf0] sm:$0xff]
    %v380 = vld [vmem:[#allocation7 + $0xf8] sm:$0xff]
    %381 = vmatprep.subr.mxu0 0.0
    %382 = vmatpush1.msra.mxu0 %v365
    %383 = vmatprep.subr.mxu0 0.0
    %384 = vmatpush1.msra.mxu0 %v366
    %385 = vmatprep.subr.mxu0 0.0
    %386 = vmatpush1.msra.mxu0 %v367
    %387 = vmatprep.subr.mxu0 0.0
    %388 = vmatpush1.msra.mxu0 %v368
    %389 = vmatprep.subr.mxu0 0.0
    %390 = vmatpush1.msra.mxu0 %v369
    %391 = vmatprep.subr.mxu0 0.0
    %392 = vmatpush1.msra.mxu0 %v370
    %393 = vmatprep.subr.mxu0 0.0
    %394 = vmatpush1.msra.mxu0 %v371
    %395 = vmatprep.subr.mxu0 0.0
    %396 = vmatpush1.msra.mxu0 %v372
    %397 = vmatprep.subr.mxu0 0.0
    %398 = vmatpush1.msra.mxu0 %v373
    %399 = vmatprep.subr.mxu0 0.0
    %400 = vmatpush1.msra.mxu0 %v374
    %401 = vmatprep.subr.mxu0 0.0
    %402 = vmatpush1.msra.mxu0 %v375
    %403 = vmatprep.subr.mxu0 0.0
    %404 = vmatpush1.msra.mxu0 %v376
    %405 = vmatprep.subr.mxu0 0.0
    %406 = vmatpush1.msra.mxu0 %v377
    %407 = vmatprep.subr.mxu0 0.0
    %408 = vmatpush1.msra.mxu0 %v378
    %409 = vmatprep.subr.mxu0 0.0
    %410 = vmatpush1.msra.mxu0 %v379
    %411 = vmatprep.subr.mxu0 0.0
    %412 = vmatpush1.msra.mxu0 %v380
    %413 = vmatprep.subr.mxu0 0.0
    %414 = vmatpush1.msra.mxu0 0.0
    %415 = vmatprep.subr.mxu0 0.0
    %416 = vmatpush1.msra.mxu0 0.0
    %417 = vmatprep.subr.mxu0 0.0
    %418 = vmatpush1.msra.mxu0 0.0
    %419 = vmatprep.subr.mxu0 0.0
    %420 = vmatpush1.msra.mxu0 0.0
    %421 = vmatprep.subr.mxu0 0.0
    %422 = vmatpush1.msra.mxu0 0.0
    %423 = vmatprep.subr.mxu0 0.0
    %424 = vmatpush1.msra.mxu0 0.0
    %425 = vmatprep.subr.mxu0 0.0
    %426 = vmatpush1.msra.mxu0 0.0
    %427 = vmatprep.subr.mxu0 0.0
    %428 = vmatpush1.msra.mxu0 0.0
    %429 = vmatprep.subr.mxu0 0.0
    %430 = vmatpush1.msra.mxu0 0.0
    %431 = vmatprep.subr.mxu0 0.0
    %432 = vmatpush1.msra.mxu0 0.0
    %433 = vmatprep.subr.mxu0 0.0
    %434 = vmatpush1.msra.mxu0 0.0
    %435 = vmatprep.subr.mxu0 0.0
    %436 = vmatpush1.msra.mxu0 0.0
    %437 = vmatprep.subr.mxu0 0.0
    %438 = vmatpush1.msra.mxu0 0.0
    %439 = vmatprep.subr.mxu0 0.0
    %440 = vmatpush1.msra.mxu0 0.0
    %441 = vmatprep.subr.mxu0 0.0
    %442 = vmatpush1.msra.mxu0 0.0
    %443 = vmatprep.subr.mxu0 0.0
    %444 = vmatpush1.msra.mxu0 0.0
    %445 = vmatprep.mubr.f32.mxu0 0.0
    %446 = vmatmul.mubr.f32.gmra.mrb[0].mxu0 %v315
    %v447 = vpop.f32.mrb[0].mxu0
    %v448 = vadd.f32 0.0, %v447
    %v449 = vpop.f32.mrb[0].mxu0
    %450 = vmatprep.mubr.f32.mxu0 0.0
    %451 = vmatmul.mubr.f32.gmra.mrb[0].mxu0 %v314
    %v452 = vpop.f32.mrb[0].mxu0
    %v453 = vadd.f32 0.0, %v452
    %v454 = vpop.f32.mrb[0].mxu0
    %455 = vmatprep.mubr.f32.mxu0 0.0
    %456 = vmatmul.mubr.f32.gmra.mrb[0].mxu0 %v313
    %v457 = vpop.f32.mrb[0].mxu0
    %v458 = vadd.f32 0.0, %v457
    %v459 = vpop.f32.mrb[0].mxu0
    %460 = vmatprep.mubr.f32.mxu0 0.0
    %461 = vmatmul.mubr.f32.gmra.mrb[0].mxu0 %v312
    %v462 = vpop.f32.mrb[0].mxu0
    %v463 = vadd.f32 0.0, %v462
    %v464 = vpop.f32.mrb[0].mxu0
    %465 = vmatprep.mubr.f32.mxu0 0.0
    %466 = vmatmul.mubr.f32.gmra.mrb[0].mxu0 %v311
    %v467 = vpop.f32.mrb[0].mxu0
    %v468 = vadd.f32 0.0, %v467
    %v469 = vpop.f32.mrb[0].mxu0
    %470 = vmatprep.mubr.f32.mxu0 0.0
    %471 = vmatmul.mubr.f32.gmra.mrb[0].mxu0 %v310
    %v472 = vpop.f32.mrb[0].mxu0
    %v473 = vadd.f32 0.0, %v472
    %v474 = vpop.f32.mrb[0].mxu0
    %475 = vmatprep.mubr.f32.mxu0 0.0
    %476 = vmatmul.mubr.f32.gmra.mrb[0].mxu0 %v309
    %v477 = vpop.f32.mrb[0].mxu0
    %v478 = vadd.f32 0.0, %v477
    %v479 = vpop.f32.mrb[0].mxu0
    %480 = vmatprep.mubr.f32.mxu0 0.0
    %481 = vmatmul.mubr.f32.gmra.mrb[0].mxu0 %v308
    %v482 = vpop.f32.mrb[0].mxu0
    %v483 = vadd.f32 0.0, %v482
    %v484 = vpop.f32.mrb[0].mxu0
    %485 = vmatprep.mubr.f32.mxu0 0.0
    %486 = vmatmul.mubr.f32.gmra.mrb[0].mxu0 %v307
    %v487 = vpop.f32.mrb[0].mxu0
    %v488 = vadd.f32 0.0, %v487
    %v489 = vpop.f32.mrb[0].mxu0
    %490 = vmatprep.mubr.f32.mxu0 0.0
    %491 = vmatmul.mubr.f32.gmra.mrb[0].mxu0 %v306
    %v492 = vpop.f32.mrb[0].mxu0
    %v493 = vadd.f32 0.0, %v492
    %v494 = vpop.f32.mrb[0].mxu0
    %495 = vmatprep.mubr.f32.mxu0 0.0
    %496 = vmatmul.mubr.f32.gmra.mrb[0].mxu0 %v305
    %v497 = vpop.f32.mrb[0].mxu0
    %v498 = vadd.f32 0.0, %v497
    %v499 = vpop.f32.mrb[0].mxu0
    %500 = vmatprep.mubr.f32.mxu0 0.0
    %501 = vmatmul.mubr.f32.gmra.mrb[0].mxu0 %v304
    %v502 = vpop.f32.mrb[0].mxu0
    %v503 = vadd.f32 0.0, %v502
    %v504 = vpop.f32.mrb[0].mxu0
    %505 = vmatprep.mubr.f32.mxu0 0.0
    %506 = vmatmul.mubr.f32.gmra.mrb[0].mxu0 %v303
    %v507 = vpop.f32.mrb[0].mxu0
    %v508 = vadd.f32 0.0, %v507
    %v509 = vpop.f32.mrb[0].mxu0
    %510 = vmatprep.mubr.f32.mxu0 0.0
    %511 = vmatmul.mubr.f32.gmra.mrb[0].mxu0 %v302
    %v512 = vpop.f32.mrb[0].mxu0
    %v513 = vadd.f32 0.0, %v512
    %v514 = vpop.f32.mrb[0].mxu0
    %515 = vmatprep.mubr.f32.mxu0 0.0
    %516 = vmatmul.mubr.f32.gmra.mrb[0].mxu0 %v301
    %v517 = vpop.f32.mrb[0].mxu0
    %v518 = vadd.f32 0.0, %v517
    %v519 = vpop.f32.mrb[0].mxu0
    %520 = vmatprep.mubr.f32.mxu0 0.0
    %521 = vmatmul.mubr.f32.gmra.mrb[0].mxu0 %v316
    %v522 = vpop.f32.mrb[0].mxu0
    %v523 = vadd.f32 0.0, %v522
    %v524 = vpop.f32.mrb[0].mxu0
    %525 = vdwg.mxu0
    %526 = vmatprep.subr.mxu0 0.0
    %527 = vmatpush1.msra.mxu0 %v349
    %528 = vmatprep.subr.mxu0 0.0
    %529 = vmatpush1.msra.mxu0 %v350
    %530 = vmatprep.subr.mxu0 0.0
    %531 = vmatpush1.msra.mxu0 %v351
    %532 = vmatprep.subr.mxu0 0.0
    %533 = vmatpush1.msra.mxu0 %v352
    %534 = vmatprep.subr.mxu0 0.0
    %535 = vmatpush1.msra.mxu0 %v353
    %536 = vmatprep.subr.mxu0 0.0
    %537 = vmatpush1.msra.mxu0 %v354
    %538 = vmatprep.subr.mxu0 0.0
    %539 = vmatpush1.msra.mxu0 %v355
    %540 = vmatprep.subr.mxu0 0.0
    %541 = vmatpush1.msra.mxu0 %v356
    %542 = vmatprep.subr.mxu0 0.0
    %543 = vmatpush1.msra.mxu0 %v357
    %544 = vmatprep.subr.mxu0 0.0
    %545 = vmatpush1.msra.mxu0 %v358
    %546 = vmatprep.subr.mxu0 0.0
    %547 = vmatpush1.msra.mxu0 %v359
    %548 = vmatprep.subr.mxu0 0.0
    %549 = vmatpush1.msra.mxu0 %v360
    %550 = vmatprep.subr.mxu0 0.0
    %551 = vmatpush1.msra.mxu0 %v361
    %552 = vmatprep.subr.mxu0 0.0
    %553 = vmatpush1.msra.mxu0 %v362
    %554 = vmatprep.subr.mxu0 0.0
    %555 = vmatpush1.msra.mxu0 %v363
    %556 = vmatprep.subr.mxu0 0.0
    %557 = vmatpush1.msra.mxu0 %v364
    %558 = vmatprep.subr.mxu0 0.0
    %559 = vmatpush1.msra.mxu0 0.0
    %560 = vmatprep.subr.mxu0 0.0
    %561 = vmatpush1.msra.mxu0 0.0
    %562 = vmatprep.subr.mxu0 0.0
    %563 = vmatpush1.msra.mxu0 0.0
    %564 = vmatprep.subr.mxu0 0.0
    %565 = vmatpush1.msra.mxu0 0.0
    %566 = vmatprep.subr.mxu0 0.0
    %567 = vmatpush1.msra.mxu0 0.0
    %568 = vmatprep.subr.mxu0 0.0
    %569 = vmatpush1.msra.mxu0 0.0
    %570 = vmatprep.subr.mxu0 0.0
    %571 = vmatpush1.msra.mxu0 0.0
    %572 = vmatprep.subr.mxu0 0.0
    %573 = vmatpush1.msra.mxu0 0.0
    %574 = vmatprep.subr.mxu0 0.0
    %575 = vmatpush1.msra.mxu0 0.0
    %576 = vmatprep.subr.mxu0 0.0
    %577 = vmatpush1.msra.mxu0 0.0
    %578 = vmatprep.subr.mxu0 0.0
    %579 = vmatpush1.msra.mxu0 0.0
    %580 = vmatprep.subr.mxu0 0.0
    %581 = vmatpush1.msra.mxu0 0.0
    %582 = vmatprep.subr.mxu0 0.0
    %583 = vmatpush1.msra.mxu0 0.0
    %584 = vmatprep.subr.mxu0 0.0
    %585 = vmatpush1.msra.mxu0 0.0
    %586 = vmatprep.subr.mxu0 0.0
    %587 = vmatpush1.msra.mxu0 0.0
    %588 = vmatprep.subr.mxu0 0.0
    %589 = vmatpush1.msra.mxu0 0.0
    %590 = vmatprep.mubr.f32.mxu0 0.0
    %591 = vmatmul.mubr.f32.gmra.mrb[0].mxu0 %v266
    %v592 = vpop.f32.mrb[0].mxu0
    %v593 = vadd.f32 %v448, %v592
    %v594 = vpop.f32.mrb[0].mxu0
    %595 = vmatprep.mubr.f32.mxu0 0.0
    %596 = vmatmul.mubr.f32.gmra.mrb[0].mxu0 %v267
    %v597 = vpop.f32.mrb[0].mxu0
    %v598 = vadd.f32 %v453, %v597
    %v599 = vpop.f32.mrb[0].mxu0
    %600 = vmatprep.mubr.f32.mxu0 0.0
    %601 = vmatmul.mubr.f32.gmra.mrb[0].mxu0 %v268
    %v602 = vpop.f32.mrb[0].mxu0
    %v603 = vadd.f32 %v458, %v602
    %v604 = vpop.f32.mrb[0].mxu0
    %605 = vmatprep.mubr.f32.mxu0 0.0
    %606 = vmatmul.mubr.f32.gmra.mrb[0].mxu0 %v269
    %v607 = vpop.f32.mrb[0].mxu0
    %v608 = vadd.f32 %v463, %v607
    %v609 = vpop.f32.mrb[0].mxu0
    %610 = vmatprep.mubr.f32.mxu0 0.0
    %611 = vmatmul.mubr.f32.gmra.mrb[0].mxu0 %v270
    %v612 = vpop.f32.mrb[0].mxu0
    %v613 = vadd.f32 %v468, %v612
    %v614 = vpop.f32.mrb[0].mxu0
    %615 = vmatprep.mubr.f32.mxu0 0.0
    %616 = vmatmul.mubr.f32.gmra.mrb[0].mxu0 %v271
    %v617 = vpop.f32.mrb[0].mxu0
    %v618 = vadd.f32 %v473, %v617
    %v619 = vpop.f32.mrb[0].mxu0
    %620 = vmatprep.mubr.f32.mxu0 0.0
    %621 = vmatmul.mubr.f32.gmra.mrb[0].mxu0 %v272
    %v622 = vpop.f32.mrb[0].mxu0
    %v623 = vadd.f32 %v478, %v622
    %v624 = vpop.f32.mrb[0].mxu0
    %625 = vmatprep.mubr.f32.mxu0 0.0
    %626 = vmatmul.mubr.f32.gmra.mrb[0].mxu0 %v273
    %v627 = vpop.f32.mrb[0].mxu0
    %v628 = vadd.f32 %v483, %v627
    %v629 = vpop.f32.mrb[0].mxu0
    %630 = vmatprep.mubr.f32.mxu0 0.0
    %631 = vmatmul.mubr.f32.gmra.mrb[0].mxu0 %v274
    %v632 = vpop.f32.mrb[0].mxu0
    %v633 = vadd.f32 %v488, %v632
    %v634 = vpop.f32.mrb[0].mxu0
    %635 = vmatprep.mubr.f32.mxu0 0.0
    %636 = vmatmul.mubr.f32.gmra.mrb[0].mxu0 %v275
    %v637 = vpop.f32.mrb[0].mxu0
    %v638 = vadd.f32 %v493, %v637
    %v639 = vpop.f32.mrb[0].mxu0
    %640 = vmatprep.mubr.f32.mxu0 0.0
    %641 = vmatmul.mubr.f32.gmra.mrb[0].mxu0 %v276
    %v642 = vpop.f32.mrb[0].mxu0
    %v643 = vadd.f32 %v498, %v642
    %v644 = vpop.f32.mrb[0].mxu0
    %645 = vmatprep.mubr.f32.mxu0 0.0
    %646 = vmatmul.mubr.f32.gmra.mrb[0].mxu0 %v277
    %v647 = vpop.f32.mrb[0].mxu0
    %v648 = vadd.f32 %v503, %v647
    %v649 = vpop.f32.mrb[0].mxu0
    %650 = vmatprep.mubr.f32.mxu0 0.0
    %651 = vmatmul.mubr.f32.gmra.mrb[0].mxu0 %v278
    %v652 = vpop.f32.mrb[0].mxu0
    %v653 = vadd.f32 %v508, %v652
    %v654 = vpop.f32.mrb[0].mxu0
    %655 = vmatprep.mubr.f32.mxu0 0.0
    %656 = vmatmul.mubr.f32.gmra.mrb[0].mxu0 %v279
    %v657 = vpop.f32.mrb[0].mxu0
    %v658 = vadd.f32 %v513, %v657
    %v659 = vpop.f32.mrb[0].mxu0
    %660 = vmatprep.mubr.f32.mxu0 0.0
    %661 = vmatmul.mubr.f32.gmra.mrb[0].mxu0 %v280
    %v662 = vpop.f32.mrb[0].mxu0
    %v663 = vadd.f32 %v518, %v662
    %v664 = vpop.f32.mrb[0].mxu0
    %665 = vmatprep.mubr.f32.mxu0 0.0
    %666 = vmatmul.mubr.f32.gmra.mrb[0].mxu0 %v281
    %v667 = vpop.f32.mrb[0].mxu0
    %v668 = vadd.f32 %v523, %v667
    %v669 = vpop.f32.mrb[0].mxu0
    %670 = vdwg.mxu0
    %v671 = vld [vmem:[#allocation7 + $0x100] sm:$0xff]
    %v672 = vld [vmem:[#allocation7 + $0x108] sm:$0xff]
    %v673 = vld [vmem:[#allocation7 + $0x110] sm:$0xff]
    %v674 = vld [vmem:[#allocation7 + $0x118] sm:$0xff]
    %v675 = vld [vmem:[#allocation7 + $0x120] sm:$0xff]
    %v676 = vld [vmem:[#allocation7 + $0x128] sm:$0xff]
    %v677 = vld [vmem:[#allocation7 + $0x130] sm:$0xff]
    %v678 = vld [vmem:[#allocation7 + $0x138] sm:$0xff]
    %v679 = vld [vmem:[#allocation7 + $0x140] sm:$0xff]
    %v680 = vld [vmem:[#allocation7 + $0x148] sm:$0xff]
    %v681 = vld [vmem:[#allocation7 + $0x150] sm:$0xff]
    %v682 = vld [vmem:[#allocation7 + $0x158] sm:$0xff]
    %v683 = vld [vmem:[#allocation7 + $0x160] sm:$0xff]
    %v684 = vld [vmem:[#allocation7 + $0x168] sm:$0xff]
    %v685 = vld [vmem:[#allocation7 + $0x170] sm:$0xff]
    %v686 = vld [vmem:[#allocation7 + $0x178] sm:$0xff]
    %687 = vmatprep.subr.mxu0 0.0
    %688 = vmatpush1.msra.mxu0 %v671
    %689 = vmatprep.subr.mxu0 0.0
    %690 = vmatpush1.msra.mxu0 %v672
    %691 = vmatprep.subr.mxu0 0.0
    %692 = vmatpush1.msra.mxu0 %v673
    %693 = vmatprep.subr.mxu0 0.0
    %694 = vmatpush1.msra.mxu0 %v674
    %695 = vmatprep.subr.mxu0 0.0
    %696 = vmatpush1.msra.mxu0 %v675
    %697 = vmatprep.subr.mxu0 0.0
    %698 = vmatpush1.msra.mxu0 %v676
    %699 = vmatprep.subr.mxu0 0.0
    %700 = vmatpush1.msra.mxu0 %v677
    %701 = vmatprep.subr.mxu0 0.0
    %702 = vmatpush1.msra.mxu0 %v678
    %703 = vmatprep.subr.mxu0 0.0
    %704 = vmatpush1.msra.mxu0 %v679
    %705 = vmatprep.subr.mxu0 0.0
    %706 = vmatpush1.msra.mxu0 %v680
    %707 = vmatprep.subr.mxu0 0.0
    %708 = vmatpush1.msra.mxu0 %v681
    %709 = vmatprep.subr.mxu0 0.0
    %710 = vmatpush1.msra.mxu0 %v682
    %711 = vmatprep.subr.mxu0 0.0
    %712 = vmatpush1.msra.mxu0 %v683
    %713 = vmatprep.subr.mxu0 0.0
    %714 = vmatpush1.msra.mxu0 %v684
    %715 = vmatprep.subr.mxu0 0.0
    %716 = vmatpush1.msra.mxu0 %v685
    %717 = vmatprep.subr.mxu0 0.0
    %718 = vmatpush1.msra.mxu0 %v686
    %719 = vmatprep.subr.mxu0 0.0
    %720 = vmatpush1.msra.mxu0 0.0
    %721 = vmatprep.subr.mxu0 0.0
    %722 = vmatpush1.msra.mxu0 0.0
    %723 = vmatprep.subr.mxu0 0.0
    %724 = vmatpush1.msra.mxu0 0.0
    %725 = vmatprep.subr.mxu0 0.0
    %726 = vmatpush1.msra.mxu0 0.0
    %727 = vmatprep.subr.mxu0 0.0
    %728 = vmatpush1.msra.mxu0 0.0
    %729 = vmatprep.subr.mxu0 0.0
    %730 = vmatpush1.msra.mxu0 0.0
    %731 = vmatprep.subr.mxu0 0.0
    %732 = vmatpush1.msra.mxu0 0.0
    %733 = vmatprep.subr.mxu0 0.0
    %734 = vmatpush1.msra.mxu0 0.0
    %735 = vmatprep.subr.mxu0 0.0
    %736 = vmatpush1.msra.mxu0 0.0
    %737 = vmatprep.subr.mxu0 0.0
    %738 = vmatpush1.msra.mxu0 0.0
    %739 = vmatprep.subr.mxu0 0.0
    %740 = vmatpush1.msra.mxu0 0.0
    %741 = vmatprep.subr.mxu0 0.0
    %742 = vmatpush1.msra.mxu0 0.0
    %743 = vmatprep.subr.mxu0 0.0
    %744 = vmatpush1.msra.mxu0 0.0
    %745 = vmatprep.subr.mxu0 0.0
    %746 = vmatpush1.msra.mxu0 0.0
    %747 = vmatprep.subr.mxu0 0.0
    %748 = vmatpush1.msra.mxu0 0.0
    %749 = vmatprep.subr.mxu0 0.0
    %750 = vmatpush1.msra.mxu0 0.0
    %751 = vmatprep.mubr.f32.mxu0 0.0
    %752 = vmatmul.mubr.f32.gmra.mrb[0].mxu0 %v347
    %v753 = vpop.f32.mrb[0].mxu0
    %v754 = vadd.f32 0.0, %v753
    %v755 = vpop.f32.mrb[0].mxu0
    %756 = vmatprep.mubr.f32.mxu0 0.0
    %757 = vmatmul.mubr.f32.gmra.mrb[0].mxu0 %v346
    %v758 = vpop.f32.mrb[0].mxu0
    %v759 = vadd.f32 0.0, %v758
    %v760 = vpop.f32.mrb[0].mxu0
    %761 = vmatprep.mubr.f32.mxu0 0.0
    %762 = vmatmul.mubr.f32.gmra.mrb[0].mxu0 %v345
    %v763 = vpop.f32.mrb[0].mxu0
    %v764 = vadd.f32 0.0, %v763
    %v765 = vpop.f32.mrb[0].mxu0
    %766 = vmatprep.mubr.f32.mxu0 0.0
    %767 = vmatmul.mubr.f32.gmra.mrb[0].mxu0 %v344
    %v768 = vpop.f32.mrb[0].mxu0
    %v769 = vadd.f32 0.0, %v768
    %v770 = vpop.f32.mrb[0].mxu0
    %771 = vmatprep.mubr.f32.mxu0 0.0
    %772 = vmatmul.mubr.f32.gmra.mrb[0].mxu0 %v343
    %v773 = vpop.f32.mrb[0].mxu0
    %v774 = vadd.f32 0.0, %v773
    %v775 = vpop.f32.mrb[0].mxu0
    %776 = vmatprep.mubr.f32.mxu0 0.0
    %777 = vmatmul.mubr.f32.gmra.mrb[0].mxu0 %v342
    %v778 = vpop.f32.mrb[0].mxu0
    %v779 = vadd.f32 0.0, %v778
    %v780 = vpop.f32.mrb[0].mxu0
    %781 = vmatprep.mubr.f32.mxu0 0.0
    %782 = vmatmul.mubr.f32.gmra.mrb[0].mxu0 %v341
    %v783 = vpop.f32.mrb[0].mxu0
    %v784 = vadd.f32 0.0, %v783
    %v785 = vpop.f32.mrb[0].mxu0
    %786 = vmatprep.mubr.f32.mxu0 0.0
    %787 = vmatmul.mubr.f32.gmra.mrb[0].mxu0 %v340
    %v788 = vpop.f32.mrb[0].mxu0
    %v789 = vadd.f32 0.0, %v788
    %v790 = vpop.f32.mrb[0].mxu0
    %791 = vmatprep.mubr.f32.mxu0 0.0
    %792 = vmatmul.mubr.f32.gmra.mrb[0].mxu0 %v339
    %v793 = vpop.f32.mrb[0].mxu0
    %v794 = vadd.f32 0.0, %v793
    %v795 = vpop.f32.mrb[0].mxu0
    %796 = vmatprep.mubr.f32.mxu0 0.0
    %797 = vmatmul.mubr.f32.gmra.mrb[0].mxu0 %v338
    %v798 = vpop.f32.mrb[0].mxu0
    %v799 = vadd.f32 0.0, %v798
    %v800 = vpop.f32.mrb[0].mxu0
    %801 = vmatprep.mubr.f32.mxu0 0.0
    %802 = vmatmul.mubr.f32.gmra.mrb[0].mxu0 %v337
    %v803 = vpop.f32.mrb[0].mxu0
    %v804 = vadd.f32 0.0, %v803
    %v805 = vpop.f32.mrb[0].mxu0
    %806 = vmatprep.mubr.f32.mxu0 0.0
    %807 = vmatmul.mubr.f32.gmra.mrb[0].mxu0 %v336
    %v808 = vpop.f32.mrb[0].mxu0
    %v809 = vadd.f32 0.0, %v808
    %v810 = vpop.f32.mrb[0].mxu0
    %811 = vmatprep.mubr.f32.mxu0 0.0
    %812 = vmatmul.mubr.f32.gmra.mrb[0].mxu0 %v335
    %v813 = vpop.f32.mrb[0].mxu0
    %v814 = vadd.f32 0.0, %v813
    %v815 = vpop.f32.mrb[0].mxu0
    %816 = vmatprep.mubr.f32.mxu0 0.0
    %817 = vmatmul.mubr.f32.gmra.mrb[0].mxu0 %v334
    %v818 = vpop.f32.mrb[0].mxu0
    %v819 = vadd.f32 0.0, %v818
    %v820 = vpop.f32.mrb[0].mxu0
    %821 = vmatprep.mubr.f32.mxu0 0.0
    %822 = vmatmul.mubr.f32.gmra.mrb[0].mxu0 %v333
    %v823 = vpop.f32.mrb[0].mxu0
    %v824 = vadd.f32 0.0, %v823
    %v825 = vpop.f32.mrb[0].mxu0
    %826 = vmatprep.mubr.f32.mxu0 0.0
    %827 = vmatmul.mubr.f32.gmra.mrb[0].mxu0 %v348
    %v828 = vpop.f32.mrb[0].mxu0
    %v829 = vadd.f32 0.0, %v828
    %v830 = vpop.f32.mrb[0].mxu0
    %831 = vdwg.mxu0
    %v832 = vadd.f32 %v593, %v754
    %v833 = vadd.f32 %v598, %v759
    %v834 = vadd.f32 %v603, %v764
    %v835 = vadd.f32 %v608, %v769
    %v836 = vadd.f32 %v613, %v774
    %v837 = vadd.f32 %v618, %v779
    %v838 = vadd.f32 %v623, %v784
    %v839 = vadd.f32 %v628, %v789
    %v840 = vadd.f32 %v633, %v794
    %v841 = vadd.f32 %v638, %v799
    %v842 = vadd.f32 %v643, %v804
    %v843 = vadd.f32 %v648, %v809
    %v844 = vadd.f32 %v653, %v814
    %v845 = vadd.f32 %v658, %v819
    %v846 = vadd.f32 %v663, %v824
    %v847 = vadd.f32 %v668, %v829
    %v848 = vld [vmem:[%s4] sm:$0x1]
    %v850 = vlaneseq
    %v851 = vshrl.u32 %v850, 7
    %v852 = vsub.s32 0, %v851
    %v853 = vrot.slane %v848, %v852
    %v855 = vadd.f32 %v832, %v853
    %v856 = vadd.f32 %v833, %v853
    %v857 = vadd.f32 %v834, %v853
    %v858 = vadd.f32 %v835, %v853
    %v859 = vadd.f32 %v836, %v853
    %v860 = vadd.f32 %v837, %v853
    %v861 = vadd.f32 %v838, %v853
    %v862 = vadd.f32 %v839, %v853
    %v863 = vadd.f32 %v840, %v853
    %v864 = vadd.f32 %v841, %v853
    %v865 = vadd.f32 %v842, %v853
    %v866 = vadd.f32 %v843, %v853
    %v867 = vadd.f32 %v844, %v853
    %v868 = vadd.f32 %v845, %v853
    %v869 = vadd.f32 %v846, %v853
    %v870 = vadd.f32 %v847, %v853
    %v871 = vmax.f32 %v855, 0.0
    %v872 = vmax.f32 %v856, 0.0
    %v873 = vmax.f32 %v857, 0.0
    %v874 = vmax.f32 %v858, 0.0
    %v875 = vmax.f32 %v859, 0.0
    %v876 = vmax.f32 %v860, 0.0
    %v877 = vmax.f32 %v861, 0.0
    %v878 = vmax.f32 %v862, 0.0
    %v879 = vmax.f32 %v863, 0.0
    %v880 = vmax.f32 %v864, 0.0
    %v881 = vmax.f32 %v865, 0.0
    %v882 = vmax.f32 %v866, 0.0
    %v883 = vmax.f32 %v867, 0.0
    %v884 = vmax.f32 %v868, 0.0
    %v885 = vmax.f32 %v869, 0.0
    %v886 = vmax.f32 %v870, 0.0
    %v887 = vadd.s32 %v299, 8
    %vm888 = vcmp.lt.s32.totalorder %v299, 12
    %vm889 = vcmp.lt.s32.totalorder %v887, 12
    %v890 = vsel %vm888, %v871, 0.0
    %v891 = vsel %vm889, %v872, 0.0
    %v892 = vsel %vm888, %v873, 0.0
    %v893 = vsel %vm889, %v874, 0.0
    %v894 = vsel %vm888, %v875, 0.0
    %v895 = vsel %vm889, %v876, 0.0
    %v896 = vsel %vm888, %v877, 0.0
    %v897 = vsel %vm889, %v878, 0.0
    %v898 = vsel %vm888, %v879, 0.0
    %v899 = vsel %vm889, %v880, 0.0
    %v900 = vsel %vm888, %v881, 0.0
    %v901 = vsel %vm889, %v882, 0.0
    %v902 = vsel %vm888, %v883, 0.0
    %v903 = vsel %vm889, %v884, 0.0
    %v904 = vsel %vm888, %v885, 0.0
    %v905 = vsel %vm889, %v886, 0.0
    %v906 = vmax.f32 %v890, %v891
    %v907 = vrot.slane %v906, 4
    %v908 = vmax.f32 %v906, %v907
    %v909 = vrot.slane %v908, 2
    %v910 = vmax.f32 %v908, %v909
    %v911 = vrot.slane %v910, 1
    %v912 = vmax.f32 %v910, %v911
    %v913 = vmax.f32 %v892, %v893
    %v914 = vrot.slane %v913, 4
    %v915 = vmax.f32 %v913, %v914
    %v916 = vrot.slane %v915, 2
    %v917 = vmax.f32 %v915, %v916
    %v918 = vrot.slane %v917, 1
    %v919 = vmax.f32 %v917, %v918
    %v920 = vmax.f32 %v894, %v895
    %v921 = vrot.slane %v920, 4
    %v922 = vmax.f32 %v920, %v921
    %v923 = vrot.slane %v922, 2
    %v924 = vmax.f32 %v922, %v923
    %v925 = vrot.slane %v924, 1
    %v926 = vmax.f32 %v924, %v925
    %v927 = vmax.f32 %v896, %v897
    %v928 = vrot.slane %v927, 4
    %v929 = vmax.f32 %v927, %v928
    %v930 = vrot.slane %v929, 2
    %v931 = vmax.f32 %v929, %v930
    %v932 = vrot.slane %v931, 1
    %v933 = vmax.f32 %v931, %v932
    %v934 = vmax.f32 %v898, %v899
    %v935 = vrot.slane %v934, 4
    %v936 = vmax.f32 %v934, %v935
    %v937 = vrot.slane %v936, 2
    %v938 = vmax.f32 %v936, %v937
    %v939 = vrot.slane %v938, 1
    %v940 = vmax.f32 %v938, %v939
    %v941 = vmax.f32 %v900, %v901
    %v942 = vrot.slane %v941, 4
    %v943 = vmax.f32 %v941, %v942
    %v944 = vrot.slane %v943, 2
    %v945 = vmax.f32 %v943, %v944
    %v946 = vrot.slane %v945, 1
    %v947 = vmax.f32 %v945, %v946
    %v948 = vmax.f32 %v902, %v903
    %v949 = vrot.slane %v948, 4
    %v950 = vmax.f32 %v948, %v949
    %v951 = vrot.slane %v950, 2
    %v952 = vmax.f32 %v950, %v951
    %v953 = vrot.slane %v952, 1
    %v954 = vmax.f32 %v952, %v953
    %v955 = vmax.f32 %v904, %v905
    %v956 = vrot.slane %v955, 4
    %v957 = vmax.f32 %v955, %v956
    %v958 = vrot.slane %v957, 2
    %v959 = vmax.f32 %v957, %v958
    %v960 = vrot.slane %v959, 1
    %v961 = vmax.f32 %v959, %v960
    %v962 = vld [vmem:[#allocation8] sm:$0xff]
    %v963 = vld [vmem:[#allocation8 + $0x8] sm:$0xff]
    %v964 = vld [vmem:[#allocation8 + $0x10] sm:$0xff]
    %v965 = vld [vmem:[#allocation8 + $0x18] sm:$0xff]
    %v966 = vld [vmem:[#allocation8 + $0x20] sm:$0xff]
    %v967 = vld [vmem:[#allocation8 + $0x28] sm:$0xff]
    %v968 = vld [vmem:[#allocation8 + $0x30] sm:$0xff]
    %v969 = vld [vmem:[#allocation8 + $0x38] sm:$0xff]
    %v970 = vld [vmem:[#allocation8 + $0x40] sm:$0xff]
    %v971 = vld [vmem:[#allocation8 + $0x48] sm:$0xff]
    %v972 = vld [vmem:[#allocation8 + $0x50] sm:$0xff]
    %v973 = vld [vmem:[#allocation8 + $0x58] sm:$0xff]
    %v974 = vld [vmem:[#allocation8 + $0x60] sm:$0xff]
    %v975 = vld [vmem:[#allocation8 + $0x68] sm:$0xff]
    %v976 = vld [vmem:[#allocation8 + $0x70] sm:$0xff]
    %v977 = vld [vmem:[#allocation8 + $0x78] sm:$0xff]
    %v978 = vld [vmem:[%s6] sm:$0x1]
    %v980 = vlaneseq
    %v981 = vshrl.u32 %v980, 7
    %v982 = vsub.s32 0, %v981
    %v983 = vrot.slane %v978, %v982
    %vm993 = vcmask 1041409
    %v994 = vsel %vm993, %v919, %v912
    %vm995 = vcmask 1042434
    %v996 = vsel %vm995, %v926, %v994
    %vm997 = vcmask 1043459
    %v998 = vsel %vm997, %v933, %v996
    %vm999 = vcmask 1044484
    %v1000 = vsel %vm999, %v940, %v998
    %vm1001 = vcmask 1045509
    %v1002 = vsel %vm1001, %v947, %v1000
    %vm1003 = vcmask 1046534
    %v1004 = vsel %vm1003, %v954, %v1002
    %vm1005 = vcmask 1047559
    %v1006 = vsel %vm1005, %v961, %v1004
    %1008 = vmatprep.subr.mxu0 0.0
    %1009 = vmatpush1.msra.mxu0 %v962
    %1010 = vmatprep.subr.mxu0 0.0
    %1011 = vmatpush1.msra.mxu0 %v963
    %1012 = vmatprep.subr.mxu0 0.0
    %1013 = vmatpush1.msra.mxu0 %v964
    %1014 = vmatprep.subr.mxu0 0.0
    %1015 = vmatpush1.msra.mxu0 %v965
    %1016 = vmatprep.subr.mxu0 0.0
    %1017 = vmatpush1.msra.mxu0 %v966
    %1018 = vmatprep.subr.mxu0 0.0
    %1019 = vmatpush1.msra.mxu0 %v967
    %1020 = vmatprep.subr.mxu0 0.0
    %1021 = vmatpush1.msra.mxu0 %v968
    %1022 = vmatprep.subr.mxu0 0.0
    %1023 = vmatpush1.msra.mxu0 %v969
    %1024 = vmatprep.subr.mxu0 0.0
    %1025 = vmatpush1.msra.mxu0 %v970
    %1026 = vmatprep.subr.mxu0 0.0
    %1027 = vmatpush1.msra.mxu0 %v971
    %1028 = vmatprep.subr.mxu0 0.0
    %1029 = vmatpush1.msra.mxu0 %v972
    %1030 = vmatprep.subr.mxu0 0.0
    %1031 = vmatpush1.msra.mxu0 %v973
    %1032 = vmatprep.subr.mxu0 0.0
    %1033 = vmatpush1.msra.mxu0 %v974
    %1034 = vmatprep.subr.mxu0 0.0
    %1035 = vmatpush1.msra.mxu0 %v975
    %1036 = vmatprep.subr.mxu0 0.0
    %1037 = vmatpush1.msra.mxu0 %v976
    %1038 = vmatprep.subr.mxu0 0.0
    %1039 = vmatpush1.msra.mxu0 %v977
    %1040 = vmatprep.subr.mxu0 0.0
    %1041 = vmatpush1.msra.mxu0 0.0
    %1042 = vmatprep.subr.mxu0 0.0
    %1043 = vmatpush1.msra.mxu0 0.0
    %1044 = vmatprep.subr.mxu0 0.0
    %1045 = vmatpush1.msra.mxu0 0.0
    %1046 = vmatprep.subr.mxu0 0.0
    %1047 = vmatpush1.msra.mxu0 0.0
    %1048 = vmatprep.subr.mxu0 0.0
    %1049 = vmatpush1.msra.mxu0 0.0
    %1050 = vmatprep.subr.mxu0 0.0
    %1051 = vmatpush1.msra.mxu0 0.0
    %1052 = vmatprep.subr.mxu0 0.0
    %1053 = vmatpush1.msra.mxu0 0.0
    %1054 = vmatprep.subr.mxu0 0.0
    %1055 = vmatpush1.msra.mxu0 0.0
    %1056 = vmatprep.subr.mxu0 0.0
    %1057 = vmatpush1.msra.mxu0 0.0
    %1058 = vmatprep.subr.mxu0 0.0
    %1059 = vmatpush1.msra.mxu0 0.0
    %1060 = vmatprep.subr.mxu0 0.0
    %1061 = vmatpush1.msra.mxu0 0.0
    %1062 = vmatprep.subr.mxu0 0.0
    %1063 = vmatpush1.msra.mxu0 0.0
    %1064 = vmatprep.subr.mxu0 0.0
    %1065 = vmatpush1.msra.mxu0 0.0
    %1066 = vmatprep.subr.mxu0 0.0
    %1067 = vmatpush1.msra.mxu0 0.0
    %1068 = vmatprep.subr.mxu0 0.0
    %1069 = vmatpush1.msra.mxu0 0.0
    %1070 = vmatprep.subr.mxu0 0.0
    %1071 = vmatpush1.msra.mxu0 0.0
    %1072 = vmatprep.mubr.f32.mxu0 0.0
    %1073 = vmatmul.mubr.f32.gmra.mrb[0].mxu0 %v1006
    %v1074 = vpop.f32.mrb[0].mxu0
    %v1075 = vadd.f32 %v983, %v1074
    %v1076 = vpop.f32.mrb[0].mxu0
    %1077 = vdwg.mxu0
    %v1078 = vmul.f32 %v1075, %v1075
    %1079 = vadd.xlane.f32.xlu0 %v1078
    %v1080 = vpop.xlane.xlu0 %1079
    %v1081 = vadd.f32 %v1080, 1e-12
    %v1082 = vrsqrt.pop %v1081
    %v1083 = vmul.f32 %v1075, %v1082
    %1084 = vst [vmem:[#allocation10] sm:$0xff] %v1083
    // Predicated region
    $region46: #{tpu_custom_call.1} parent=1 // pred_check
      _
    $region47: #{tpu_custom_call.1} parent=1 // pred_check_branch
      %1086 = sbr.rel (0) target = $region49
    $region48: #{tpu_custom_call.1} parent=1 // pred_region
      %s1088 = ssub.s32 128, 128
      %1089 = vsyncadd [#allocation4], %s1088
      %s1091 = sshll.u32 [#allocation10], 4
      %s1092 = int_to_ptr.vmem [resolvable:$true] %s1091
      %1094 = dma.vmem_to_hbm [thread:$0]  %s1092, 128, %s7, [#allocation4]
    $region49: #{tpu_custom_call.1} parent=1 // pred_fallthru
      _
    // Predicated region
    $region50: #{tpu_custom_call.1} parent=1 // pred_check
      _
    $region51: #{tpu_custom_call.1} parent=1 // pred_check_branch
      %1096 = sbr.rel (0) target = $region53
    $region52: #{tpu_custom_call.1} parent=1 // pred_region
      %1097 = dma.done [#allocation4], 128
    $region53: #{tpu_custom_call.1} parent=1 // pred_fallthru
      _
    %1098 = vsyncpa [#allocation3], 1
    %1099 = vsyncpa [#allocation6], 1
    %1100 = vsyncpa [#allocation9], 1
    %1101 = vsyncpa [#allocation4], 1

</llo_original>
